<compile_context>
chip_gen: v5e
topology: v5e:2x2
jax: 0.10.0
libtpu: 0.0.40
codegen_flags: <defaults>
</compile_context>

<pallas_src>
import math

import jax
import jax.numpy as jnp
from jax import lax
from jax.experimental import pallas as pl
from jax.experimental.pallas import tpu as pltpu


# ----------------------- tiled linear:  y = x @ W + b -----------------------

def _linear_kernel(x_ref, w_ref, b_ref, o_ref, acc_ref):
    k = pl.program_id(2)

    @pl.when(k == 0)
    def _():
        acc_ref[...] = jnp.zeros_like(acc_ref)

    acc_ref[...] += jnp.dot(x_ref[...], w_ref[...],
                            preferred_element_type=jnp.float32)

    @pl.when(k == pl.num_programs(2) - 1)
    def _():
        o_ref[...] = (acc_ref[...] + b_ref[...]).astype(o_ref.dtype)


def _pick_tile(dim, pref):
    # Use the preferred (128-multiple) tile when it divides the dim, otherwise
    # fall back to the full dimension (always legal: block == full array dim).
    if dim <= pref:
        return dim
    return pref if dim % pref == 0 else dim


def pallas_linear(x2d, w_kn, b, *, tm_pref=256, tn_pref=256, tk_pref=512):
    """y = x2d @ w_kn + b.  w_kn is stored pre-transposed: (in_feat, out_feat)."""
    M, K = x2d.shape
    N = w_kn.shape[1]
    tm, tn, tk = _pick_tile(M, tm_pref), _pick_tile(N, tn_pref), _pick_tile(K, tk_pref)
    grid = (M // tm, N // tn, K // tk)
    return pl.pallas_call(
        _linear_kernel,
        out_shape=jax.ShapeDtypeStruct((M, N), x2d.dtype),
        grid=grid,
        in_specs=[
            pl.BlockSpec((tm, tk), lambda i, j, k: (i, k)),
            pl.BlockSpec((tk, tn), lambda i, j, k: (k, j)),
            pl.BlockSpec((1, tn), lambda i, j, k: (0, j)),
        ],
        out_specs=pl.BlockSpec((tm, tn), lambda i, j, k: (i, j)),
        scratch_shapes=[pltpu.VMEM((tm, tn), jnp.float32)],
        compiler_params=pltpu.CompilerParams(
            dimension_semantics=("parallel", "parallel", "arbitrary")),
    )(x2d, w_kn, b.reshape(1, N))


# --------------------------- attention (all heads) ---------------------------

def make_attn_kernel(num_heads, d_k, scale_inv):
    d_model = num_heads * d_k

    def attn_kernel(qkv_ref, o_ref):
        # One batch element per program. Single lane-dense (S, 3*d_model) load;
        # heads are extracted with static column slices (no HBM transposes).
        qkv = qkv_ref[0]                                   # (S, 3*d_model)
        outs = []
        for h in range(num_heads):
            lo = h * d_k
            q = qkv[:, lo:lo + d_k] * scale_inv            # pre-scaled Q (S, d_k)
            k = qkv[:, d_model + lo:d_model + lo + d_k]
            v = qkv[:, 2 * d_model + lo:2 * d_model + lo + d_k]

            # QK^T via dot_general contracting the last dims (no explicit k.T).
            s = lax.dot_general(q, k, (((1,), (1,)), ((), ())),
                                preferred_element_type=jnp.float32)  # (S, S)
            m = jnp.max(s, axis=-1, keepdims=True)
            p = jnp.exp(s - m)
            l = jnp.sum(p, axis=-1, keepdims=True)
            inv_l = pl.reciprocal(l, approx=True)          # EUP slot
            inv_l = inv_l * (2.0 - l * inv_l)              # one Newton step -> f32 acc.
            o_h = jnp.dot(p, v, preferred_element_type=jnp.float32) * inv_l
            outs.append(o_h)
        # Heads interleaved along d_model -> lane-dense (S, d_model) store.
        o_ref[0] = jnp.concatenate(outs, axis=-1).astype(o_ref.dtype)

    return attn_kernel


def pallas_attention(qkv, num_heads):
    """qkv: (B, S, 3*d_model) with [Q | K | V] along the last axis."""
    B, S, three_d = qkv.shape
    d_model = three_d // 3
    d_k = d_model // num_heads
    scale_inv = 1.0 / math.sqrt(d_k)
    cost = pl.CostEstimate(
        flops=int(4 * B * S * S * d_model),                # QK^T + PV
        transcendentals=int(B * num_heads * S * S),        # exp
        bytes_accessed=int((qkv.size + B * S * d_model) * 4),
    )
    return pl.pallas_call(
        make_attn_kernel(num_heads, d_k, scale_inv),
        out_shape=jax.ShapeDtypeStruct((B, S, d_model), qkv.dtype),
        grid=(B,),
        in_specs=[pl.BlockSpec((1, S, three_d), lambda b: (b, 0, 0))],
        out_specs=pl.BlockSpec((1, S, d_model), lambda b: (b, 0, 0)),
        compiler_params=pltpu.CompilerParams(
            dimension_semantics=("parallel",)),
        cost_estimate=cost,
    )(qkv)


# ------------------------------ forward pass --------------------------------

def keops_mha_forward(x, params, num_heads, matmul_dtype=None):
    """matmul_dtype=jnp.bfloat16 is recommended on v6e/v7x for the projections
    (MXU-native operands, ~2x less HBM traffic); softmax stats stay f32."""
    B, S, d_model = x.shape
    x2d = x.reshape(B * S, d_model)
    w_qkv, w_o = params["W_qkv"], params["W_o"]
    if matmul_dtype is not None:
        x2d, w_qkv, w_o = (t.astype(matmul_dtype) for t in (x2d, w_qkv, w_o))

    # Fused Q/K/V projection: one pass over x, one kernel launch.
    qkv = pallas_linear(x2d, w_qkv, params["b_qkv"])       # (B*S, 3*d_model)
    qkv = qkv.reshape(B, S, 3 * d_model)

    # Attention with in-kernel head split/merge (no wrapper transposes).
    attn = pallas_attention(qkv, num_heads)                # (B, S, d_model)

    out2d = pallas_linear(attn.reshape(B * S, d_model), w_o, params["b_o"])
    return out2d.reshape(B, S, d_model)


# -------------------------------- parameters --------------------------------

def init_params(key, d_model):
    # nn.Linear-style init U(-1/sqrt(fan_in), 1/sqrt(fan_in)); weights are
    # pre-transposed to (in, out) ONCE here and Q/K/V fused, so the forward
    # never materializes w.T or three separate projection passes.
    bound = 1.0 / math.sqrt(d_model)
    keys = jax.random.split(key, 8)

    def lin(kw, kb):
        w = jax.random.uniform(kw, (d_model, d_model), jnp.float32, -bound, bound)
        b = jax.random.uniform(kb, (d_model,), jnp.float32, -bound, bound)
        return w, b

    W_q, b_q = lin(keys[0], keys[1])
    W_k, b_k = lin(keys[2], keys[3])
    W_v, b_v = lin(keys[4], keys[5])
    W_o, b_o = lin(keys[6], keys[7])
    W_qkv = jnp.concatenate([W_q.T, W_k.T, W_v.T], axis=1)   # (d_model, 3*d_model)
    b_qkv = jnp.concatenate([b_q, b_k, b_v], axis=0)         # (3*d_model,)
    return dict(W_qkv=W_qkv, b_qkv=b_qkv, W_o=W_o.T, b_o=b_o)


# ------------------------------ JAX reference --------------------------------

def reference_forward(x, params, num_heads):
    B, S, d_model = x.shape
    d_k = d_model // num_heads
    qkv = x @ params["W_qkv"] + params["b_qkv"]
    Q, K, V = jnp.split(qkv, 3, axis=-1)

    def heads(t):
        return t.reshape(B, S, num_heads, d_k).transpose(0, 2, 1, 3)

    Q, K, V = heads(Q), heads(K), heads(V)
    s = jnp.einsum("bhqd,bhkd->bhqk", Q, K) / math.sqrt(d_k)
    p = jax.nn.softmax(s, axis=-1)
    o = jnp.einsum("bhqk,bhkd->bhqd", p, V).transpose(0, 2, 1, 3).reshape(B, S, d_model)
    return o @ params["W_o"] + params["b_o"]


if __name__ == "__main__":
    B, S, d_model, num_heads = 2, 8, 32, 4

    key = jax.random.PRNGKey(0)
    kx, kp = jax.random.split(key)
    x = jax.random.normal(kx, (B, S, d_model), dtype=jnp.float32)
    params = init_params(kp, d_model)

    out = jax.block_until_ready(keops_mha_forward(x, params, num_heads))
    ref = reference_forward(x, params, num_heads)

    assert out.shape == (B, S, d_model)
    assert jnp.allclose(out, ref, atol=5e-4, rtol=5e-4), \
        float(jnp.max(jnp.abs(out - ref)))

    print("KERNEL_OK")
</pallas_src>

<mosaic_0001>
module attributes {stable_mosaic.version = 11 : i64} {
  func.func @_linear_kernel(%arg0: i32, %arg1: i32, %arg2: i32, %arg3: memref<16x32xf32, #tpu.memory_space<vmem>>, %arg4: memref<32x96xf32, #tpu.memory_space<vmem>>, %arg5: memref<1x96xf32, #tpu.memory_space<vmem>>, %arg6: memref<16x96xf32, #tpu.memory_space<vmem>>, %arg7: memref<16x96xf32, #tpu.memory_space<vmem>>) attributes {dimension_semantics = [#tpu.dimension_semantics<parallel>, #tpu.dimension_semantics<parallel>, #tpu.dimension_semantics<arbitrary>], iteration_bounds = array<i64: 1, 1, 1>, scalar_prefetch = 0 : i64, scratch_operands = 1 : i64, tpu.core_type = #tpu.core_type<tc>, window_params = [{transform_indices = @transform_0, window_bounds = array<i64: 16, 32>}, {transform_indices = @transform_1, window_bounds = array<i64: 32, 96>}, {transform_indices = @transform_2, window_bounds = array<i64: 1, 96>}, {transform_indices = @transform_3, window_bounds = array<i64: 16, 96>}]} {
    %c0_i32 = arith.constant 0 : i32
    %0 = arith.cmpi eq, %arg2, %c0_i32 : i32
    %1 = arith.extui %0 : i1 to i32
    %c0_i32_0 = arith.constant 0 : i32
    %2 = arith.cmpi ne, %1, %c0_i32_0 : i32
    scf.if %2 {
      %cst_10 = arith.constant 0.000000e+00 : f32
      %12 = vector.broadcast %cst_10 : f32 to vector<16x96xf32>
      %c0_11 = arith.constant 0 : index
      %c0_12 = arith.constant 0 : index
      %13 = vector.load %arg7[%c0_11, %c0_12] : memref<16x96xf32, #tpu.memory_space<vmem>>, vector<16x96xf32>
      tpu.vector_store %arg7[%c0_11, %c0_12], %12 {strides = array<i32>} : memref<16x96xf32, #tpu.memory_space<vmem>>, vector<16x96xf32>,
    } else {
    }
    %c0 = arith.constant 0 : index
    %c0_1 = arith.constant 0 : index
    %3 = vector.load %arg7[%c0, %c0_1] : memref<16x96xf32, #tpu.memory_space<vmem>>, vector<16x96xf32>
    %c0_2 = arith.constant 0 : index
    %c0_3 = arith.constant 0 : index
    %4 = vector.load %arg3[%c0_2, %c0_3] : memref<16x32xf32, #tpu.memory_space<vmem>>, vector<16x32xf32>
    %c0_4 = arith.constant 0 : index
    %c0_5 = arith.constant 0 : index
    %5 = vector.load %arg4[%c0_4, %c0_5] : memref<32x96xf32, #tpu.memory_space<vmem>>, vector<32x96xf32>
    %cst = arith.constant dense<0.000000e+00> : vector<16x96xf32>
    %6 = tpu.matmul %4, %5, %cst {dimension_numbers = #tpu.dot_dimension_numbers<[1], [0], [0], [1], [0, 0, 1, 1], [], []>} : vector<16x32xf32>, vector<32x96xf32>, vector<16x96xf32> -> vector<16x96xf32>
    %7 = arith.addf %3, %6 : vector<16x96xf32>
    %c0_6 = arith.constant 0 : index
    %c0_7 = arith.constant 0 : index
    %8 = vector.load %arg7[%c0_6, %c0_7] : memref<16x96xf32, #tpu.memory_space<vmem>>, vector<16x96xf32>
    tpu.vector_store %arg7[%c0_6, %c0_7], %7 {strides = array<i32>} : memref<16x96xf32, #tpu.memory_space<vmem>>, vector<16x96xf32>,
    %c0_i32_8 = arith.constant 0 : i32
    %9 = arith.cmpi eq, %arg2, %c0_i32_8 : i32
    %10 = arith.extui %9 : i1 to i32
    %c0_i32_9 = arith.constant 0 : i32
    %11 = arith.cmpi ne, %10, %c0_i32_9 : i32
    scf.if %11 {
      %c0_10 = arith.constant 0 : index
      %c0_11 = arith.constant 0 : index
      %12 = vector.load %arg7[%c0_10, %c0_11] : memref<16x96xf32, #tpu.memory_space<vmem>>, vector<16x96xf32>
      %c0_12 = arith.constant 0 : index
      %c0_13 = arith.constant 0 : index
      %13 = vector.load %arg5[%c0_12, %c0_13] : memref<1x96xf32, #tpu.memory_space<vmem>>, vector<1x96xf32>
      %14 = vector.broadcast %13 : vector<1x96xf32> to vector<16x96xf32>
      %15 = arith.addf %12, %14 : vector<16x96xf32>
      %c0_14 = arith.constant 0 : index
      %c0_15 = arith.constant 0 : index
      %16 = vector.load %arg6[%c0_14, %c0_15] : memref<16x96xf32, #tpu.memory_space<vmem>>, vector<16x96xf32>
      tpu.vector_store %arg6[%c0_14, %c0_15], %15 {strides = array<i32>} : memref<16x96xf32, #tpu.memory_space<vmem>>, vector<16x96xf32>,
    } else {
    }
    return
  }
  func.func @transform_0(%arg0: i32, %arg1: i32, %arg2: i32) -> (i32, i32) {
    %c0_i32 = arith.constant 0 : i32
    return %arg0, %arg2 : i32, i32
  }
  func.func @transform_1(%arg0: i32, %arg1: i32, %arg2: i32) -> (i32, i32) {
    %c0_i32 = arith.constant 0 : i32
    return %arg2, %arg1 : i32, i32
  }
  func.func @transform_2(%arg0: i32, %arg1: i32, %arg2: i32) -> (i32, i32) {
    %c0_i32 = arith.constant 0 : i32
    %c0_i32_0 = arith.constant 0 : i32
    return %c0_i32, %arg1 : i32, i32
  }
  func.func @transform_3(%arg0: i32, %arg1: i32, %arg2: i32) -> (i32, i32) {
    %c0_i32 = arith.constant 0 : i32
    return %arg0, %arg1 : i32, i32
  }
}

</mosaic_0001>

<llo_original>
// kernel: tpu_custom_call.1
$region0: #{tpu_custom_call.1}
  #allocation0 [shape = 'u32[]', space=smem, size = 0x4, offset = 0x4, fixed_abs, tag = 'smem constant byte address 0x4 - core index']
  #allocation1 [shape = 'u32[72,128]{1,0:T(1,128)}', space=vmem, size = 0x9000, scoped, tag = 'internal scratch']
  #allocation2 [shape = 'f32[16,96]{1,0:T(8,128)}', space=vmem, size = 0x2000, scoped, tag = 'scratch operand']
  %s0 = inlined_call_operand.hbm [shape: f32[16,32], index: 0, kind: input, shape index: {}]
  %s1 = inlined_call_operand.hbm [shape: f32[32,96], index: 1, kind: input, shape index: {}]
  %s2 = inlined_call_operand.vmem [shape: f32[1,96], index: 2, kind: input, shape index: {}]
  %s3 = inlined_call_operand.hbm [shape: f32[16,96], index: 3, kind: output, shape index: {}]
  %s4 = sld [smem:[#allocation0]]
  $region38: #{tpu_custom_call.1} parent=0
    _
  %s6 = ssub.s32 1, %s4
  %s7 = scalar_select 0, %s6, %s4
  $region1: #{tpu_custom_call.1} parent=0
    #allocation3 [shape = 'u8[8192]{0}', space=vmem, size = 0x2000, scoped, tag = 'input window, operand 0, single buffered']
    #allocation4 [shape = 's32[1]{0}', space=sflag, size = 0x4, scoped, tag = 'scoped memory for tpu_custom_call.1']
    #allocation5 [shape = 's32[1]{0}', space=sflag, size = 0x4, scoped, tag = 'scoped memory for tpu_custom_call.1']
    #allocation6 [shape = 'u8[16384]{0}', space=vmem, size = 0x4000, scoped, tag = 'input window, operand 1, single buffered']
    #allocation7 [shape = 's32[1]{0}', space=sflag, size = 0x4, scoped, tag = 'scoped memory for tpu_custom_call.1']
    #allocation8 [shape = 'u8[8192]{0}', space=vmem, size = 0x2000, scoped, tag = 'output window, operand 0, single buffered']
    %8 = vsyncpa [#allocation4], 0
    %9 = vsyncpa [#allocation7], 0
    %10 = vsyncpa [#allocation5], 0
    // Predicated region
    $region2: #{tpu_custom_call.1} parent=1 // pred_check
      _
    $region3: #{tpu_custom_call.1} parent=1 // pred_check_branch
      %12 = sbr.rel (0) target = $region5
    $region4: #{tpu_custom_call.1} parent=1 // pred_region
      %14 = vsyncadd [#allocation4], 0
      %s15 = sshll.u32 %s0, 4
      %s16 = int_to_ptr.hbm [resolvable:$true] %s15
      %s17 = sshll.u32 [#allocation3], 4
      %s18 = int_to_ptr.vmem [resolvable:$true] %s17
      %23 = dma.hbm_to_vmem [thread:$0]  %s16, 256, %s18, [#allocation4], 128, 128, 8
    $region5: #{tpu_custom_call.1} parent=1 // pred_fallthru
      _
    // Predicated region
    $region6: #{tpu_custom_call.1} parent=1 // pred_check
      _
    $region7: #{tpu_custom_call.1} parent=1 // pred_check_branch
      %25 = sbr.rel (0) target = $region9
    $region8: #{tpu_custom_call.1} parent=1 // pred_region
      %27 = vsyncadd [#allocation7], 0
      %s28 = sshll.u32 %s1, 4
      %s29 = int_to_ptr.hbm [resolvable:$true] %s28
      %s30 = sshll.u32 [#allocation6], 4
      %s31 = int_to_ptr.vmem [resolvable:$true] %s30
      %36 = dma.hbm_to_vmem [thread:$0]  %s29, 512, %s31, [#allocation7], 128, 128, 8
    $region9: #{tpu_custom_call.1} parent=1 // pred_fallthru
      _
    // Predicated region
    $region10: #{tpu_custom_call.1} parent=1 // pred_check
      _
    $region11: #{tpu_custom_call.1} parent=1 // pred_check_branch
      %38 = sbr.rel (0) target = $region13
    $region12: #{tpu_custom_call.1} parent=1 // pred_region
      _
    $region13: #{tpu_custom_call.1} parent=1 // pred_fallthru
      _
    // Predicated region
    $region14: #{tpu_custom_call.1} parent=1 // pred_check
      _
    $region15: #{tpu_custom_call.1} parent=1 // pred_check_branch
      %40 = sbr.rel (0) target = $region17
    $region16: #{tpu_custom_call.1} parent=1 // pred_region
      %42 = dma.done [#allocation4], 256
    $region17: #{tpu_custom_call.1} parent=1 // pred_fallthru
      _
    // Predicated region
    $region18: #{tpu_custom_call.1} parent=1 // pred_check
      _
    $region19: #{tpu_custom_call.1} parent=1 // pred_check_branch
      %44 = sbr.rel (0) target = $region21
    $region20: #{tpu_custom_call.1} parent=1 // pred_region
      %46 = dma.done [#allocation7], 512
    $region21: #{tpu_custom_call.1} parent=1 // pred_fallthru
      _
    %p47 = scmp.eq.s32.totalorder 0, 0
    // Predicated region
    $region22: #{tpu_custom_call.1} parent=1 // pred_check
      %p48 = pneg %p47
    $region23: #{tpu_custom_call.1} parent=1 // pred_check_branch
      %50 = sbr.rel (%p48) target = $region25
    $region24: #{tpu_custom_call.1} parent=1 // pred_region
      %vm51 = vcmask 785408
      %52 = vst.msk [vmem:[#allocation2] sm:$0xff] %vm51, 0.0
      %53 = vst.msk [vmem:[#allocation2 + $0x8] sm:$0xff] %vm51, 0.0
    $region25: #{tpu_custom_call.1} parent=1 // pred_fallthru
      _
    %v54 = vld [vmem:[#allocation2] sm:$0xff]
    %v55 = vld [vmem:[#allocation2 + $0x8] sm:$0xff]
    %v56 = vld [vmem:[#allocation3] sm:$0xff]
    %v57 = vld [vmem:[#allocation3 + $0x8] sm:$0xff]
    %v58 = vld [vmem:[#allocation6] sm:$0xff]
    %v59 = vld [vmem:[#allocation6 + $0x8] sm:$0xff]
    %v60 = vld [vmem:[#allocation6 + $0x10] sm:$0xff]
    %v61 = vld [vmem:[#allocation6 + $0x18] sm:$0xff]
    %vm62 = vcmask 261120
    %v64 = vsel %vm62, %v56, 0
    %v67 = vsel %vm62, %v57, 0
    %69 = vmatpush.msra.mxu0 0.0
    %70 = vmatpush.msra.mxu0 0.0
    %71 = vmatpush.msra.mxu0 0.0
    %72 = vmatpush.msra.mxu0 0.0
    %73 = vmatpush.msra.mxu0 0.0
    %74 = vmatpush.msra.mxu0 0.0
    %75 = vmatpush.msra.mxu0 0.0
    %76 = vmatpush.msra.mxu0 0.0
    %77 = vmatpush.msra.mxu0 0.0
    %78 = vmatpush.msra.mxu0 0.0
    %79 = vmatpush.msra.mxu0 0.0
    %80 = vmatpush.msra.mxu0 0.0
    %81 = vmatpush.msra.mxu0 %v61
    %82 = vmatpush.msra.mxu0 %v60
    %83 = vmatpush.msra.mxu0 %v59
    %84 = vmatpush.msra.mxu0 %v58
    %85 = vmatmul.f32.gmra.mxu0 %v64
    %v86 = vpop.f32.mrf.mxu0
    %v87 = vadd.f32 0.0, %v86
    %88 = vmatmul.f32.gmra.mxu0 %v67
    %v89 = vpop.f32.mrf.mxu0
    %v90 = vadd.f32 0.0, %v89
    %91 = vdwg.mxu0
    %v92 = vadd.f32 %v54, %v87
    %v93 = vadd.f32 %v55, %v90
    %vm94 = vcmask 785408
    %95 = vst.msk [vmem:[#allocation2] sm:$0xff] %vm94, %v92
    %96 = vst.msk [vmem:[#allocation2 + $0x8] sm:$0xff] %vm94, %v93
    // Predicated region
    $region26: #{tpu_custom_call.1} parent=1 // pred_check
      %p97 = pneg %p47
    $region27: #{tpu_custom_call.1} parent=1 // pred_check_branch
      %99 = sbr.rel (%p97) target = $region29
    $region28: #{tpu_custom_call.1} parent=1 // pred_region
      %v100 = vld [vmem:[#allocation2] sm:$0xff]
      %v101 = vld [vmem:[#allocation2 + $0x8] sm:$0xff]
      %v102 = vld [vmem:[%s2] sm:$0x1]
      %v104 = vperm.slane %v102, 0
      %v106 = vadd.f32 %v100, %v104
      %v107 = vadd.f32 %v101, %v104
      %108 = vst.msk [vmem:[#allocation8] sm:$0xff] %vm94, %v106
      %109 = vst.msk [vmem:[#allocation8 + $0x8] sm:$0xff] %vm94, %v107
    $region29: #{tpu_custom_call.1} parent=1 // pred_fallthru
      _
    // Predicated region
    $region30: #{tpu_custom_call.1} parent=1 // pred_check
      _
    $region31: #{tpu_custom_call.1} parent=1 // pred_check_branch
      %111 = sbr.rel (0) target = $region33
    $region32: #{tpu_custom_call.1} parent=1 // pred_region
      %113 = vsyncadd [#allocation5], 0
      %s114 = sshll.u32 [#allocation8], 4
      %s115 = int_to_ptr.vmem [resolvable:$true] %s114
      %s116 = sshll.u32 %s3, 4
      %s117 = int_to_ptr.hbm [resolvable:$true] %s116
      %122 = dma.vmem_to_hbm [thread:$0]  %s115, 256, %s117, [#allocation5], 128, 128, 8
    $region33: #{tpu_custom_call.1} parent=1 // pred_fallthru
      _
    // Predicated region
    $region34: #{tpu_custom_call.1} parent=1 // pred_check
      _
    $region35: #{tpu_custom_call.1} parent=1 // pred_check_branch
      %124 = sbr.rel (0) target = $region37
    $region36: #{tpu_custom_call.1} parent=1 // pred_region
      %126 = dma.done [#allocation5], 256
    $region37: #{tpu_custom_call.1} parent=1 // pred_fallthru
      _
    %127 = vsyncpa [#allocation4], 1
    %128 = vsyncpa [#allocation7], 1
    %129 = vsyncpa [#allocation5], 1

</llo_original>
